<compile_context>
chip_gen: v7x
topology: tpu7x:2x2x1
jax: 0.10.0
libtpu: 0.0.40
codegen_flags: <defaults>
</compile_context>

<pallas_src>
import jax
import jax.numpy as jnp
from jax.experimental import pallas as pl
from jax.experimental.pallas import tpu as pltpu


def _relu_kernel(x_ref, o_ref):
    # Elementwise ReLU on the current VMEM tile (pure VPU work).
    # Weak-typed 0 (int literal) avoids dtype promotion for any float dtype.
    o_ref[...] = jnp.maximum(x_ref[...], 0).astype(o_ref.dtype)


def _num_tensorcores() -> int:
    """Best-effort TensorCores-per-chip (megacore) detection."""
    try:
        info = pltpu.get_tpu_info()
        for attr in ("num_cores", "num_tensorcores", "tensorcores_per_chip", "core_count"):
            v = getattr(info, attr, None)
            if isinstance(v, int) and v > 0:
                return v
    except Exception:
        pass
    try:
        kind = jax.devices()[0].device_kind.lower()
        # v7x (and v4 megacore) expose 2 TensorCores per chip; v5e/v6e have 1.
        if "v7" in kind or "v4" in kind:
            return 2
    except Exception:
        pass
    return 1


def _choose_layout(n: int, sublane: int, splits: int):
    """Pick (lanes, rows) with rows*lanes == n, lanes a multiple of 128.

    Preference (widest lanes within each tier):
      tier 1: rows divisible by sublane*splits  (even, 8-aligned per-core blocks)
      tier 2: rows divisible by sublane         (8-aligned single block)
      tier 3: any exact divisor >= 128
    Returns None if n is not a multiple of 128.
    """
    tier1 = tier2 = tier3 = None
    for lanes in (1024, 512, 256, 128):
        if n % lanes:
            continue
        rows = n // lanes
        if tier1 is None and rows % (sublane * splits) == 0:
            tier1 = (lanes, rows)
        if tier2 is None and rows % sublane == 0:
            tier2 = (lanes, rows)
        if tier3 is None:
            tier3 = (lanes, rows)
    return tier1 or tier2 or tier3


def relu_pallas(x: jax.Array, *, target_block_bytes: int = 2 * 1024 * 1024) -> jax.Array:
    """ReLU via a Pallas TPU kernel. Accepts any shape / float dtype."""
    orig_shape = x.shape
    dtype = x.dtype
    n = x.size
    if n == 0:
        return x
    itemsize = jnp.dtype(dtype).itemsize
    # Sublane packing: 8 rows for 32-bit, 16 for bf16, 32 for 8-bit dtypes.
    sublane = 8 * max(1, 4 // itemsize)

    splits = _num_tensorcores()
    layout = _choose_layout(n, sublane, splits)
    if layout is None:
        # No >=128-lane exact factorization.  A standalone Pallas call would
        # need pad + slice (two extra full HBM passes); plain XLA is strictly
        # cheaper for this bandwidth-bound op.
        return jnp.maximum(x, 0)
    lanes, rows = layout
    x2d = jnp.reshape(x, (rows, lanes))

    # Largest sublane-aligned row tile that keeps one buffer <= target_block_bytes.
    max_tr = max(sublane, (target_block_bytes // (lanes * itemsize)) // sublane * sublane)

    if rows <= max_tr:
        if splits > 1 and rows % (sublane * splits) == 0 and rows // splits >= sublane:
            # Megacore: even, 8-aligned blocks, one per TensorCore.
            tr = rows // splits
        else:
            # Single-TC chip (or indivisible): one block, zero extra steps.
            tr = rows
    else:
        # Large-tensor path: sublane-aligned tiles; ragged tail (if any) is
        # masked by Pallas.  Per-step overhead is amortized at this size.
        tr = max_tr

    grid = (pl.cdiv(rows, tr),)

    # TODO(synk): for best end-to-end perf this ReLU should be fused into the
    # producing conv/BN kernel rather than run as a standalone pallas_call.
    out2d = pl.pallas_call(
        _relu_kernel,
        out_shape=jax.ShapeDtypeStruct((rows, lanes), dtype),
        grid_spec=pltpu.PrefetchScalarGridSpec(
            num_scalar_prefetch=0,
            grid=grid,
            in_specs=[pl.BlockSpec((tr, lanes), lambda i: (i, 0))],
            out_specs=pl.BlockSpec((tr, lanes), lambda i: (i, 0)),
        ),
        compiler_params=pltpu.CompilerParams(
            dimension_semantics=("parallel",),
        ),
        cost_estimate=pl.CostEstimate(
            flops=n, transcendentals=0, bytes_accessed=2 * n * itemsize),
        input_output_aliases={0: 0},
    )(x2d)

    return jnp.reshape(out2d, orig_shape)


if __name__ == "__main__":
    key = jax.random.PRNGKey(0)

    # Shape from the module's forward: ReLU over a [1, 24, 112, 112] NCHW map.
    x = jax.random.normal(key, (1, 24, 112, 112), dtype=jnp.float32)
    y_ref = jnp.maximum(x, 0.0)  # computed before the (aliased) kernel call

    y = jax.block_until_ready(relu_pallas(x))
    assert y.shape == x.shape and y.dtype == x.dtype
    assert bool(jnp.allclose(y, y_ref)), "mismatch vs reference ReLU (main shape)"

    # Awkward shape exercises the no-pad XLA fallback path (n % 128 != 0).
    x_small = jax.random.normal(jax.random.PRNGKey(1), (3, 5, 7), dtype=jnp.float32)
    y_small = jax.block_until_ready(relu_pallas(x_small))
    assert bool(jnp.allclose(y_small, jnp.maximum(x_small, 0.0))), "mismatch (odd shape)"

    print("KERNEL_OK")
</pallas_src>

<mosaic_0001>
module attributes {stable_mosaic.version = 11 : i64} {
  func.func @_relu_kernel(%arg0: i32, %arg1: memref<1176x256xf32, #tpu.memory_space<vmem>>, %arg2: memref<1176x256xf32, #tpu.memory_space<vmem>>) attributes {dimension_semantics = [#tpu.dimension_semantics<parallel>], iteration_bounds = array<i64: 1>, scalar_prefetch = 0 : i64, scratch_operands = 0 : i64, tpu.core_type = #tpu.core_type<tc>, window_params = [{transform_indices = @transform_0, window_bounds = array<i64: 1176, 256>}, {transform_indices = @transform_1, window_bounds = array<i64: 1176, 256>}]} {
    %c0 = arith.constant 0 : index
    %c0_0 = arith.constant 0 : index
    %0 = vector.load %arg1[%c0, %c0_0] : memref<1176x256xf32, #tpu.memory_space<vmem>>, vector<1176x256xf32>
    %cst = arith.constant 0.000000e+00 : f32
    %1 = vector.broadcast %cst : f32 to vector<1176x256xf32>
    %2 = arith.maximumf %0, %1 : vector<1176x256xf32>
    %c0_1 = arith.constant 0 : index
    %c0_2 = arith.constant 0 : index
    %3 = vector.load %arg2[%c0_1, %c0_2] : memref<1176x256xf32, #tpu.memory_space<vmem>>, vector<1176x256xf32>
    tpu.vector_store %arg2[%c0_1, %c0_2], %2 {strides = array<i32>} : memref<1176x256xf32, #tpu.memory_space<vmem>>, vector<1176x256xf32>,
    return
  }
  func.func @transform_0(%arg0: i32) -> (i32, i32) {
    %c0_i32 = arith.constant 0 : i32
    %c0_i32_0 = arith.constant 0 : i32
    return %arg0, %c0_i32 : i32, i32
  }
  func.func @transform_1(%arg0: i32) -> (i32, i32) {
    %c0_i32 = arith.constant 0 : i32
    %c0_i32_0 = arith.constant 0 : i32
    return %arg0, %c0_i32 : i32, i32
  }
}

</mosaic_0001>

<llo_original>
// kernel: tpu_custom_call.1
$region0: #{tpu_custom_call.1}
  #allocation0 [shape = 'u32[]', space=smem, size = 0x4, offset = 0x4, fixed_abs, tag = 'smem constant byte address 0x4 - core index']
  #allocation1 [shape = 'u32[144,128]{1,0:T(1,128)}', space=vmem, size = 0x12000, scoped, tag = 'internal scratch']
  %s0 = inlined_call_operand.hbm [shape: f32[1176,256], index: 0, kind: input, shape index: {}, may-alias: {0,1}]
  %s1 = inlined_call_operand.hbm [shape: f32[1176,256], index: 1, kind: output, shape index: {}, may-alias: {0,1}]
  %s2 = sld [smem:[#allocation0]]
  $region18: #{tpu_custom_call.1} parent=0
    _
  %s4 = ssub.s32 1, %s2
  %s5 = scalar_select 0, %s4, %s2
  $region1: #{tpu_custom_call.1} parent=0
    #allocation2 [shape = 'u8[1204224]{0}', space=vmem, size = 0x126000, scoped, tag = 'input window, operand 0, single buffered']
    #allocation3 [shape = 's32[1]{0}', space=sflag, size = 0x4, scoped, tag = 'scoped memory for tpu_custom_call.1']
    #allocation4 [shape = 's32[1]{0}', space=sflag, size = 0x4, scoped, tag = 'scoped memory for tpu_custom_call.1']
    #allocation5 [shape = 'u8[1204224]{0}', space=vmem, size = 0x126000, scoped, tag = 'output window, operand 0, single buffered']
    %6 = vsyncpa [#allocation3], 0
    %7 = vsyncpa [#allocation4], 0
    // Predicated region
    $region2: #{tpu_custom_call.1} parent=1 // pred_check
      _
    $region3: #{tpu_custom_call.1} parent=1 // pred_check_branch
      %9 = sbr.rel (0) target = $region5
    $region4: #{tpu_custom_call.1} parent=1 // pred_region
      %s11 = ssub.s32 37632, 37632
      %12 = vsyncadd [#allocation3], %s11
      %s13 = sshll.u32 [#allocation2], 4
      %s14 = int_to_ptr.vmem [resolvable:$true] %s13
      %19 = dma.hbm_to_vmem [thread:$0]  %s0, 37632, %s14, [#allocation3], 256, 256, 16
    $region5: #{tpu_custom_call.1} parent=1 // pred_fallthru
      _
    // Predicated region
    $region6: #{tpu_custom_call.1} parent=1 // pred_check
      _
    $region7: #{tpu_custom_call.1} parent=1 // pred_check_branch
      %21 = sbr.rel (0) target = $region9
    $region8: #{tpu_custom_call.1} parent=1 // pred_region
      %22 = dma.done [#allocation3], 37632
    $region9: #{tpu_custom_call.1} parent=1 // pred_fallthru
      _
    %v23 = vld [vmem:[#allocation2] sm:$0xff]
    %v24 = vld [vmem:[#allocation2 + $0x8] sm:$0xff]
    %v25 = vld [vmem:[#allocation2 + $0x10] sm:$0xff]
    %v26 = vld [vmem:[#allocation2 + $0x18] sm:$0xff]
    %v27 = vld [vmem:[#allocation2 + $0x20] sm:$0xff]
    %v28 = vld [vmem:[#allocation2 + $0x28] sm:$0xff]
    %v29 = vld [vmem:[#allocation2 + $0x30] sm:$0xff]
    %v30 = vld [vmem:[#allocation2 + $0x38] sm:$0xff]
    %v31 = vld [vmem:[#allocation2 + $0x40] sm:$0xff]
    %v32 = vld [vmem:[#allocation2 + $0x48] sm:$0xff]
    %v33 = vld [vmem:[#allocation2 + $0x50] sm:$0xff]
    %v34 = vld [vmem:[#allocation2 + $0x58] sm:$0xff]
    %v35 = vld [vmem:[#allocation2 + $0x60] sm:$0xff]
    %v36 = vld [vmem:[#allocation2 + $0x68] sm:$0xff]
    %v37 = vld [vmem:[#allocation2 + $0x70] sm:$0xff]
    %v38 = vld [vmem:[#allocation2 + $0x78] sm:$0xff]
    %v39 = vld [vmem:[#allocation2 + $0x80] sm:$0xff]
    %v40 = vld [vmem:[#allocation2 + $0x88] sm:$0xff]
    %v41 = vld [vmem:[#allocation2 + $0x90] sm:$0xff]
    %v42 = vld [vmem:[#allocation2 + $0x98] sm:$0xff]
    %v43 = vld [vmem:[#allocation2 + $0xa0] sm:$0xff]
    %v44 = vld [vmem:[#allocation2 + $0xa8] sm:$0xff]
    %v45 = vld [vmem:[#allocation2 + $0xb0] sm:$0xff]
    %v46 = vld [vmem:[#allocation2 + $0xb8] sm:$0xff]
    %v47 = vld [vmem:[#allocation2 + $0xc0] sm:$0xff]
    %v48 = vld [vmem:[#allocation2 + $0xc8] sm:$0xff]
    %v49 = vld [vmem:[#allocation2 + $0xd0] sm:$0xff]
    %v50 = vld [vmem:[#allocation2 + $0xd8] sm:$0xff]
    %v51 = vld [vmem:[#allocation2 + $0xe0] sm:$0xff]
    %v52 = vld [vmem:[#allocation2 + $0xe8] sm:$0xff]
    %v53 = vld [vmem:[#allocation2 + $0xf0] sm:$0xff]
    %v54 = vld [vmem:[#allocation2 + $0xf8] sm:$0xff]
    %v55 = vld [vmem:[#allocation2 + $0x100] sm:$0xff]
    %v56 = vld [vmem:[#allocation2 + $0x108] sm:$0xff]
    %v57 = vld [vmem:[#allocation2 + $0x110] sm:$0xff]
    %v58 = vld [vmem:[#allocation2 + $0x118] sm:$0xff]
    %v59 = vld [vmem:[#allocation2 + $0x120] sm:$0xff]
    %v60 = vld [vmem:[#allocation2 + $0x128] sm:$0xff]
    %v61 = vld [vmem:[#allocation2 + $0x130] sm:$0xff]
    %v62 = vld [vmem:[#allocation2 + $0x138] sm:$0xff]
    %v63 = vld [vmem:[#allocation2 + $0x140] sm:$0xff]
    %v64 = vld [vmem:[#allocation2 + $0x148] sm:$0xff]
    %v65 = vld [vmem:[#allocation2 + $0x150] sm:$0xff]
    %v66 = vld [vmem:[#allocation2 + $0x158] sm:$0xff]
    %v67 = vld [vmem:[#allocation2 + $0x160] sm:$0xff]
    %v68 = vld [vmem:[#allocation2 + $0x168] sm:$0xff]
    %v69 = vld [vmem:[#allocation2 + $0x170] sm:$0xff]
    %v70 = vld [vmem:[#allocation2 + $0x178] sm:$0xff]
    %v71 = vld [vmem:[#allocation2 + $0x180] sm:$0xff]
    %v72 = vld [vmem:[#allocation2 + $0x188] sm:$0xff]
    %v73 = vld [vmem:[#allocation2 + $0x190] sm:$0xff]
    %v74 = vld [vmem:[#allocation2 + $0x198] sm:$0xff]
    %v75 = vld [vmem:[#allocation2 + $0x1a0] sm:$0xff]
    %v76 = vld [vmem:[#allocation2 + $0x1a8] sm:$0xff]
    %v77 = vld [vmem:[#allocation2 + $0x1b0] sm:$0xff]
    %v78 = vld [vmem:[#allocation2 + $0x1b8] sm:$0xff]
    %v79 = vld [vmem:[#allocation2 + $0x1c0] sm:$0xff]
    %v80 = vld [vmem:[#allocation2 + $0x1c8] sm:$0xff]
    %v81 = vld [vmem:[#allocation2 + $0x1d0] sm:$0xff]
    %v82 = vld [vmem:[#allocation2 + $0x1d8] sm:$0xff]
    %v83 = vld [vmem:[#allocation2 + $0x1e0] sm:$0xff]
    %v84 = vld [vmem:[#allocation2 + $0x1e8] sm:$0xff]
    %v85 = vld [vmem:[#allocation2 + $0x1f0] sm:$0xff]
    %v86 = vld [vmem:[#allocation2 + $0x1f8] sm:$0xff]
    %v87 = vld [vmem:[#allocation2 + $0x200] sm:$0xff]
    %v88 = vld [vmem:[#allocation2 + $0x208] sm:$0xff]
    %v89 = vld [vmem:[#allocation2 + $0x210] sm:$0xff]
    %v90 = vld [vmem:[#allocation2 + $0x218] sm:$0xff]
    %v91 = vld [vmem:[#allocation2 + $0x220] sm:$0xff]
    %v92 = vld [vmem:[#allocation2 + $0x228] sm:$0xff]
    %v93 = vld [vmem:[#allocation2 + $0x230] sm:$0xff]
    %v94 = vld [vmem:[#allocation2 + $0x238] sm:$0xff]
    %v95 = vld [vmem:[#allocation2 + $0x240] sm:$0xff]
    %v96 = vld [vmem:[#allocation2 + $0x248] sm:$0xff]
    %v97 = vld [vmem:[#allocation2 + $0x250] sm:$0xff]
    %v98 = vld [vmem:[#allocation2 + $0x258] sm:$0xff]
    %v99 = vld [vmem:[#allocation2 + $0x260] sm:$0xff]
    %v100 = vld [vmem:[#allocation2 + $0x268] sm:$0xff]
    %v101 = vld [vmem:[#allocation2 + $0x270] sm:$0xff]
    %v102 = vld [vmem:[#allocation2 + $0x278] sm:$0xff]
    %v103 = vld [vmem:[#allocation2 + $0x280] sm:$0xff]
    %v104 = vld [vmem:[#allocation2 + $0x288] sm:$0xff]
    %v105 = vld [vmem:[#allocation2 + $0x290] sm:$0xff]
    %v106 = vld [vmem:[#allocation2 + $0x298] sm:$0xff]
    %v107 = vld [vmem:[#allocation2 + $0x2a0] sm:$0xff]
    %v108 = vld [vmem:[#allocation2 + $0x2a8] sm:$0xff]
    %v109 = vld [vmem:[#allocation2 + $0x2b0] sm:$0xff]
    %v110 = vld [vmem:[#allocation2 + $0x2b8] sm:$0xff]
    %v111 = vld [vmem:[#allocation2 + $0x2c0] sm:$0xff]
    %v112 = vld [vmem:[#allocation2 + $0x2c8] sm:$0xff]
    %v113 = vld [vmem:[#allocation2 + $0x2d0] sm:$0xff]
    %v114 = vld [vmem:[#allocation2 + $0x2d8] sm:$0xff]
    %v115 = vld [vmem:[#allocation2 + $0x2e0] sm:$0xff]
    %v116 = vld [vmem:[#allocation2 + $0x2e8] sm:$0xff]
    %v117 = vld [vmem:[#allocation2 + $0x2f0] sm:$0xff]
    %v118 = vld [vmem:[#allocation2 + $0x2f8] sm:$0xff]
    %v119 = vld [vmem:[#allocation2 + $0x300] sm:$0xff]
    %v120 = vld [vmem:[#allocation2 + $0x308] sm:$0xff]
    %v121 = vld [vmem:[#allocation2 + $0x310] sm:$0xff]
    %v122 = vld [vmem:[#allocation2 + $0x318] sm:$0xff]
    %v123 = vld [vmem:[#allocation2 + $0x320] sm:$0xff]
    %v124 = vld [vmem:[#allocation2 + $0x328] sm:$0xff]
    %v125 = vld [vmem:[#allocation2 + $0x330] sm:$0xff]
    %v126 = vld [vmem:[#allocation2 + $0x338] sm:$0xff]
    %v127 = vld [vmem:[#allocation2 + $0x340] sm:$0xff]
    %v128 = vld [vmem:[#allocation2 + $0x348] sm:$0xff]
    %v129 = vld [vmem:[#allocation2 + $0x350] sm:$0xff]
    %v130 = vld [vmem:[#allocation2 + $0x358] sm:$0xff]
    %v131 = vld [vmem:[#allocation2 + $0x360] sm:$0xff]
    %v132 = vld [vmem:[#allocation2 + $0x368] sm:$0xff]
    %v133 = vld [vmem:[#allocation2 + $0x370] sm:$0xff]
    %v134 = vld [vmem:[#allocation2 + $0x378] sm:$0xff]
    %v135 = vld [vmem:[#allocation2 + $0x380] sm:$0xff]
    %v136 = vld [vmem:[#allocation2 + $0x388] sm:$0xff]
    %v137 = vld [vmem:[#allocation2 + $0x390] sm:$0xff]
    %v138 = vld [vmem:[#allocation2 + $0x398] sm:$0xff]
    %v139 = vld [vmem:[#allocation2 + $0x3a0] sm:$0xff]
    %v140 = vld [vmem:[#allocation2 + $0x3a8] sm:$0xff]
    %v141 = vld [vmem:[#allocation2 + $0x3b0] sm:$0xff]
    %v142 = vld [vmem:[#allocation2 + $0x3b8] sm:$0xff]
    %v143 = vld [vmem:[#allocation2 + $0x3c0] sm:$0xff]
    %v144 = vld [vmem:[#allocation2 + $0x3c8] sm:$0xff]
    %v145 = vld [vmem:[#allocation2 + $0x3d0] sm:$0xff]
    %v146 = vld [vmem:[#allocation2 + $0x3d8] sm:$0xff]
    %v147 = vld [vmem:[#allocation2 + $0x3e0] sm:$0xff]
    %v148 = vld [vmem:[#allocation2 + $0x3e8] sm:$0xff]
    %v149 = vld [vmem:[#allocation2 + $0x3f0] sm:$0xff]
    %v150 = vld [vmem:[#allocation2 + $0x3f8] sm:$0xff]
    %v151 = vld [vmem:[#allocation2 + $0x400] sm:$0xff]
    %v152 = vld [vmem:[#allocation2 + $0x408] sm:$0xff]
    %v153 = vld [vmem:[#allocation2 + $0x410] sm:$0xff]
    %v154 = vld [vmem:[#allocation2 + $0x418] sm:$0xff]
    %v155 = vld [vmem:[#allocation2 + $0x420] sm:$0xff]
    %v156 = vld [vmem:[#allocation2 + $0x428] sm:$0xff]
    %v157 = vld [vmem:[#allocation2 + $0x430] sm:$0xff]
    %v158 = vld [vmem:[#allocation2 + $0x438] sm:$0xff]
    %v159 = vld [vmem:[#allocation2 + $0x440] sm:$0xff]
    %v160 = vld [vmem:[#allocation2 + $0x448] sm:$0xff]
    %v161 = vld [vmem:[#allocation2 + $0x450] sm:$0xff]
    %v162 = vld [vmem:[#allocation2 + $0x458] sm:$0xff]
    %v163 = vld [vmem:[#allocation2 + $0x460] sm:$0xff]
    %v164 = vld [vmem:[#allocation2 + $0x468] sm:$0xff]
    %v165 = vld [vmem:[#allocation2 + $0x470] sm:$0xff]
    %v166 = vld [vmem:[#allocation2 + $0x478] sm:$0xff]
    %v167 = vld [vmem:[#allocation2 + $0x480] sm:$0xff]
    %v168 = vld [vmem:[#allocation2 + $0x488] sm:$0xff]
    %v169 = vld [vmem:[#allocation2 + $0x490] sm:$0xff]
    %v170 = vld [vmem:[#allocation2 + $0x498] sm:$0xff]
    %v171 = vld [vmem:[#allocation2 + $0x4a0] sm:$0xff]
    %v172 = vld [vmem:[#allocation2 + $0x4a8] sm:$0xff]
    %v173 = vld [vmem:[#allocation2 + $0x4b0] sm:$0xff]
    %v174 = vld [vmem:[#allocation2 + $0x4b8] sm:$0xff]
    %v175 = vld [vmem:[#allocation2 + $0x4c0] sm:$0xff]
    %v176 = vld [vmem:[#allocation2 + $0x4c8] sm:$0xff]
    %v177 = vld [vmem:[#allocation2 + $0x4d0] sm:$0xff]
    %v178 = vld [vmem:[#allocation2 + $0x4d8] sm:$0xff]
    %v179 = vld [vmem:[#allocation2 + $0x4e0] sm:$0xff]
    %v180 = vld [vmem:[#allocation2 + $0x4e8] sm:$0xff]
    %v181 = vld [vmem:[#allocation2 + $0x4f0] sm:$0xff]
    %v182 = vld [vmem:[#allocation2 + $0x4f8] sm:$0xff]
    %v183 = vld [vmem:[#allocation2 + $0x500] sm:$0xff]
    %v184 = vld [vmem:[#allocation2 + $0x508] sm:$0xff]
    %v185 = vld [vmem:[#allocation2 + $0x510] sm:$0xff]
    %v186 = vld [vmem:[#allocation2 + $0x518] sm:$0xff]
    %v187 = vld [vmem:[#allocation2 + $0x520] sm:$0xff]
    %v188 = vld [vmem:[#allocation2 + $0x528] sm:$0xff]
    %v189 = vld [vmem:[#allocation2 + $0x530] sm:$0xff]
    %v190 = vld [vmem:[#allocation2 + $0x538] sm:$0xff]
    %v191 = vld [vmem:[#allocation2 + $0x540] sm:$0xff]
    %v192 = vld [vmem:[#allocation2 + $0x548] sm:$0xff]
    %v193 = vld [vmem:[#allocation2 + $0x550] sm:$0xff]
    %v194 = vld [vmem:[#allocation2 + $0x558] sm:$0xff]
    %v195 = vld [vmem:[#allocation2 + $0x560] sm:$0xff]
    %v196 = vld [vmem:[#allocation2 + $0x568] sm:$0xff]
    %v197 = vld [vmem:[#allocation2 + $0x570] sm:$0xff]
    %v198 = vld [vmem:[#allocation2 + $0x578] sm:$0xff]
    %v199 = vld [vmem:[#allocation2 + $0x580] sm:$0xff]
    %v200 = vld [vmem:[#allocation2 + $0x588] sm:$0xff]
    %v201 = vld [vmem:[#allocation2 + $0x590] sm:$0xff]
    %v202 = vld [vmem:[#allocation2 + $0x598] sm:$0xff]
    %v203 = vld [vmem:[#allocation2 + $0x5a0] sm:$0xff]
    %v204 = vld [vmem:[#allocation2 + $0x5a8] sm:$0xff]
    %v205 = vld [vmem:[#allocation2 + $0x5b0] sm:$0xff]
    %v206 = vld [vmem:[#allocation2 + $0x5b8] sm:$0xff]
    %v207 = vld [vmem:[#allocation2 + $0x5c0] sm:$0xff]
    %v208 = vld [vmem:[#allocation2 + $0x5c8] sm:$0xff]
    %v209 = vld [vmem:[#allocation2 + $0x5d0] sm:$0xff]
    %v210 = vld [vmem:[#allocation2 + $0x5d8] sm:$0xff]
    %v211 = vld [vmem:[#allocation2 + $0x5e0] sm:$0xff]
    %v212 = vld [vmem:[#allocation2 + $0x5e8] sm:$0xff]
    %v213 = vld [vmem:[#allocation2 + $0x5f0] sm:$0xff]
    %v214 = vld [vmem:[#allocation2 + $0x5f8] sm:$0xff]
    %v215 = vld [vmem:[#allocation2 + $0x600] sm:$0xff]
    %v216 = vld [vmem:[#allocation2 + $0x608] sm:$0xff]
    %v217 = vld [vmem:[#allocation2 + $0x610] sm:$0xff]
    %v218 = vld [vmem:[#allocation2 + $0x618] sm:$0xff]
    %v219 = vld [vmem:[#allocation2 + $0x620] sm:$0xff]
    %v220 = vld [vmem:[#allocation2 + $0x628] sm:$0xff]
    %v221 = vld [vmem:[#allocation2 + $0x630] sm:$0xff]
    %v222 = vld [vmem:[#allocation2 + $0x638] sm:$0xff]
    %v223 = vld [vmem:[#allocation2 + $0x640] sm:$0xff]
    %v224 = vld [vmem:[#allocation2 + $0x648] sm:$0xff]
    %v225 = vld [vmem:[#allocation2 + $0x650] sm:$0xff]
    %v226 = vld [vmem:[#allocation2 + $0x658] sm:$0xff]
    %v227 = vld [vmem:[#allocation2 + $0x660] sm:$0xff]
    %v228 = vld [vmem:[#allocation2 + $0x668] sm:$0xff]
    %v229 = vld [vmem:[#allocation2 + $0x670] sm:$0xff]
    %v230 = vld [vmem:[#allocation2 + $0x678] sm:$0xff]
    %v231 = vld [vmem:[#allocation2 + $0x680] sm:$0xff]
    %v232 = vld [vmem:[#allocation2 + $0x688] sm:$0xff]
    %v233 = vld [vmem:[#allocation2 + $0x690] sm:$0xff]
    %v234 = vld [vmem:[#allocation2 + $0x698] sm:$0xff]
    %v235 = vld [vmem:[#allocation2 + $0x6a0] sm:$0xff]
    %v236 = vld [vmem:[#allocation2 + $0x6a8] sm:$0xff]
    %v237 = vld [vmem:[#allocation2 + $0x6b0] sm:$0xff]
    %v238 = vld [vmem:[#allocation2 + $0x6b8] sm:$0xff]
    %v239 = vld [vmem:[#allocation2 + $0x6c0] sm:$0xff]
    %v240 = vld [vmem:[#allocation2 + $0x6c8] sm:$0xff]
    %v241 = vld [vmem:[#allocation2 + $0x6d0] sm:$0xff]
    %v242 = vld [vmem:[#allocation2 + $0x6d8] sm:$0xff]
    %v243 = vld [vmem:[#allocation2 + $0x6e0] sm:$0xff]
    %v244 = vld [vmem:[#allocation2 + $0x6e8] sm:$0xff]
    %v245 = vld [vmem:[#allocation2 + $0x6f0] sm:$0xff]
    %v246 = vld [vmem:[#allocation2 + $0x6f8] sm:$0xff]
    %v247 = vld [vmem:[#allocation2 + $0x700] sm:$0xff]
    %v248 = vld [vmem:[#allocation2 + $0x708] sm:$0xff]
    %v249 = vld [vmem:[#allocation2 + $0x710] sm:$0xff]
    %v250 = vld [vmem:[#allocation2 + $0x718] sm:$0xff]
    %v251 = vld [vmem:[#allocation2 + $0x720] sm:$0xff]
    %v252 = vld [vmem:[#allocation2 + $0x728] sm:$0xff]
    %v253 = vld [vmem:[#allocation2 + $0x730] sm:$0xff]
    %v254 = vld [vmem:[#allocation2 + $0x738] sm:$0xff]
    %v255 = vld [vmem:[#allocation2 + $0x740] sm:$0xff]
    %v256 = vld [vmem:[#allocation2 + $0x748] sm:$0xff]
    %v257 = vld [vmem:[#allocation2 + $0x750] sm:$0xff]
    %v258 = vld [vmem:[#allocation2 + $0x758] sm:$0xff]
    %v259 = vld [vmem:[#allocation2 + $0x760] sm:$0xff]
    %v260 = vld [vmem:[#allocation2 + $0x768] sm:$0xff]
    %v261 = vld [vmem:[#allocation2 + $0x770] sm:$0xff]
    %v262 = vld [vmem:[#allocation2 + $0x778] sm:$0xff]
    %v263 = vld [vmem:[#allocation2 + $0x780] sm:$0xff]
    %v264 = vld [vmem:[#allocation2 + $0x788] sm:$0xff]
    %v265 = vld [vmem:[#allocation2 + $0x790] sm:$0xff]
    %v266 = vld [vmem:[#allocation2 + $0x798] sm:$0xff]
    %v267 = vld [vmem:[#allocation2 + $0x7a0] sm:$0xff]
    %v268 = vld [vmem:[#allocation2 + $0x7a8] sm:$0xff]
    %v269 = vld [vmem:[#allocation2 + $0x7b0] sm:$0xff]
    %v270 = vld [vmem:[#allocation2 + $0x7b8] sm:$0xff]
    %v271 = vld [vmem:[#allocation2 + $0x7c0] sm:$0xff]
    %v272 = vld [vmem:[#allocation2 + $0x7c8] sm:$0xff]
    %v273 = vld [vmem:[#allocation2 + $0x7d0] sm:$0xff]
    %v274 = vld [vmem:[#allocation2 + $0x7d8] sm:$0xff]
    %v275 = vld [vmem:[#allocation2 + $0x7e0] sm:$0xff]
    %v276 = vld [vmem:[#allocation2 + $0x7e8] sm:$0xff]
    %v277 = vld [vmem:[#allocation2 + $0x7f0] sm:$0xff]
    %v278 = vld [vmem:[#allocation2 + $0x7f8] sm:$0xff]
    %v279 = vld [vmem:[#allocation2 + $0x800] sm:$0xff]
    %v280 = vld [vmem:[#allocation2 + $0x808] sm:$0xff]
    %v281 = vld [vmem:[#allocation2 + $0x810] sm:$0xff]
    %v282 = vld [vmem:[#allocation2 + $0x818] sm:$0xff]
    %v283 = vld [vmem:[#allocation2 + $0x820] sm:$0xff]
    %v284 = vld [vmem:[#allocation2 + $0x828] sm:$0xff]
    %v285 = vld [vmem:[#allocation2 + $0x830] sm:$0xff]
    %v286 = vld [vmem:[#allocation2 + $0x838] sm:$0xff]
    %v287 = vld [vmem:[#allocation2 + $0x840] sm:$0xff]
    %v288 = vld [vmem:[#allocation2 + $0x848] sm:$0xff]
    %v289 = vld [vmem:[#allocation2 + $0x850] sm:$0xff]
    %v290 = vld [vmem:[#allocation2 + $0x858] sm:$0xff]
    %v291 = vld [vmem:[#allocation2 + $0x860] sm:$0xff]
    %v292 = vld [vmem:[#allocation2 + $0x868] sm:$0xff]
    %v293 = vld [vmem:[#allocation2 + $0x870] sm:$0xff]
    %v294 = vld [vmem:[#allocation2 + $0x878] sm:$0xff]
    %v295 = vld [vmem:[#allocation2 + $0x880] sm:$0xff]
    %v296 = vld [vmem:[#allocation2 + $0x888] sm:$0xff]
    %v297 = vld [vmem:[#allocation2 + $0x890] sm:$0xff]
    %v298 = vld [vmem:[#allocation2 + $0x898] sm:$0xff]
    %v299 = vld [vmem:[#allocation2 + $0x8a0] sm:$0xff]
    %v300 = vld [vmem:[#allocation2 + $0x8a8] sm:$0xff]
    %v301 = vld [vmem:[#allocation2 + $0x8b0] sm:$0xff]
    %v302 = vld [vmem:[#allocation2 + $0x8b8] sm:$0xff]
    %v303 = vld [vmem:[#allocation2 + $0x8c0] sm:$0xff]
    %v304 = vld [vmem:[#allocation2 + $0x8c8] sm:$0xff]
    %v305 = vld [vmem:[#allocation2 + $0x8d0] sm:$0xff]
    %v306 = vld [vmem:[#allocation2 + $0x8d8] sm:$0xff]
    %v307 = vld [vmem:[#allocation2 + $0x8e0] sm:$0xff]
    %v308 = vld [vmem:[#allocation2 + $0x8e8] sm:$0xff]
    %v309 = vld [vmem:[#allocation2 + $0x8f0] sm:$0xff]
    %v310 = vld [vmem:[#allocation2 + $0x8f8] sm:$0xff]
    %v311 = vld [vmem:[#allocation2 + $0x900] sm:$0xff]
    %v312 = vld [vmem:[#allocation2 + $0x908] sm:$0xff]
    %v313 = vld [vmem:[#allocation2 + $0x910] sm:$0xff]
    %v314 = vld [vmem:[#allocation2 + $0x918] sm:$0xff]
    %v315 = vld [vmem:[#allocation2 + $0x920] sm:$0xff]
    %v316 = vld [vmem:[#allocation2 + $0x928] sm:$0xff]
    %v317 = vmax.f32 %v23, 0.0
    %v318 = vmax.f32 %v24, 0.0
    %v319 = vmax.f32 %v25, 0.0
    %v320 = vmax.f32 %v26, 0.0
    %v321 = vmax.f32 %v27, 0.0
    %v322 = vmax.f32 %v28, 0.0
    %v323 = vmax.f32 %v29, 0.0
    %v324 = vmax.f32 %v30, 0.0
    %v325 = vmax.f32 %v31, 0.0
    %v326 = vmax.f32 %v32, 0.0
    %v327 = vmax.f32 %v33, 0.0
    %v328 = vmax.f32 %v34, 0.0
    %v329 = vmax.f32 %v35, 0.0
    %v330 = vmax.f32 %v36, 0.0
    %v331 = vmax.f32 %v37, 0.0
    %v332 = vmax.f32 %v38, 0.0
    %v333 = vmax.f32 %v39, 0.0
    %v334 = vmax.f32 %v40, 0.0
    %v335 = vmax.f32 %v41, 0.0
    %v336 = vmax.f32 %v42, 0.0
    %v337 = vmax.f32 %v43, 0.0
    %v338 = vmax.f32 %v44, 0.0
    %v339 = vmax.f32 %v45, 0.0
    %v340 = vmax.f32 %v46, 0.0
    %v341 = vmax.f32 %v47, 0.0
    %v342 = vmax.f32 %v48, 0.0
    %v343 = vmax.f32 %v49, 0.0
    %v344 = vmax.f32 %v50, 0.0
    %v345 = vmax.f32 %v51, 0.0
    %v346 = vmax.f32 %v52, 0.0
    %v347 = vmax.f32 %v53, 0.0
    %v348 = vmax.f32 %v54, 0.0
    %v349 = vmax.f32 %v55, 0.0
    %v350 = vmax.f32 %v56, 0.0
    %v351 = vmax.f32 %v57, 0.0
    %v352 = vmax.f32 %v58, 0.0
    %v353 = vmax.f32 %v59, 0.0
    %v354 = vmax.f32 %v60, 0.0
    %v355 = vmax.f32 %v61, 0.0
    %v356 = vmax.f32 %v62, 0.0
    %v357 = vmax.f32 %v63, 0.0
    %v358 = vmax.f32 %v64, 0.0
    %v359 = vmax.f32 %v65, 0.0
    %v360 = vmax.f32 %v66, 0.0
    %v361 = vmax.f32 %v67, 0.0
    %v362 = vmax.f32 %v68, 0.0
    %v363 = vmax.f32 %v69, 0.0
    %v364 = vmax.f32 %v70, 0.0
    %v365 = vmax.f32 %v71, 0.0
    %v366 = vmax.f32 %v72, 0.0
    %v367 = vmax.f32 %v73, 0.0
    %v368 = vmax.f32 %v74, 0.0
    %v369 = vmax.f32 %v75, 0.0
    %v370 = vmax.f32 %v76, 0.0
    %v371 = vmax.f32 %v77, 0.0
    %v372 = vmax.f32 %v78, 0.0
    %v373 = vmax.f32 %v79, 0.0
    %v374 = vmax.f32 %v80, 0.0
    %v375 = vmax.f32 %v81, 0.0
    %v376 = vmax.f32 %v82, 0.0
    %v377 = vmax.f32 %v83, 0.0
    %v378 = vmax.f32 %v84, 0.0
    %v379 = vmax.f32 %v85, 0.0
    %v380 = vmax.f32 %v86, 0.0
    %v381 = vmax.f32 %v87, 0.0
    %v382 = vmax.f32 %v88, 0.0
    %v383 = vmax.f32 %v89, 0.0
    %v384 = vmax.f32 %v90, 0.0
    %v385 = vmax.f32 %v91, 0.0
    %v386 = vmax.f32 %v92, 0.0
    %v387 = vmax.f32 %v93, 0.0
    %v388 = vmax.f32 %v94, 0.0
    %v389 = vmax.f32 %v95, 0.0
    %v390 = vmax.f32 %v96, 0.0
    %v391 = vmax.f32 %v97, 0.0
    %v392 = vmax.f32 %v98, 0.0
    %v393 = vmax.f32 %v99, 0.0
    %v394 = vmax.f32 %v100, 0.0
    %v395 = vmax.f32 %v101, 0.0
    %v396 = vmax.f32 %v102, 0.0
    %v397 = vmax.f32 %v103, 0.0
    %v398 = vmax.f32 %v104, 0.0
    %v399 = vmax.f32 %v105, 0.0
    %v400 = vmax.f32 %v106, 0.0
    %v401 = vmax.f32 %v107, 0.0
    %v402 = vmax.f32 %v108, 0.0
    %v403 = vmax.f32 %v109, 0.0
    %v404 = vmax.f32 %v110, 0.0
    %v405 = vmax.f32 %v111, 0.0
    %v406 = vmax.f32 %v112, 0.0
    %v407 = vmax.f32 %v113, 0.0
    %v408 = vmax.f32 %v114, 0.0
    %v409 = vmax.f32 %v115, 0.0
    %v410 = vmax.f32 %v116, 0.0
    %v411 = vmax.f32 %v117, 0.0
    %v412 = vmax.f32 %v118, 0.0
    %v413 = vmax.f32 %v119, 0.0
    %v414 = vmax.f32 %v120, 0.0
    %v415 = vmax.f32 %v121, 0.0
    %v416 = vmax.f32 %v122, 0.0
    %v417 = vmax.f32 %v123, 0.0
    %v418 = vmax.f32 %v124, 0.0
    %v419 = vmax.f32 %v125, 0.0
    %v420 = vmax.f32 %v126, 0.0
    %v421 = vmax.f32 %v127, 0.0
    %v422 = vmax.f32 %v128, 0.0
    %v423 = vmax.f32 %v129, 0.0
    %v424 = vmax.f32 %v130, 0.0
    %v425 = vmax.f32 %v131, 0.0
    %v426 = vmax.f32 %v132, 0.0
    %v427 = vmax.f32 %v133, 0.0
    %v428 = vmax.f32 %v134, 0.0
    %v429 = vmax.f32 %v135, 0.0
    %v430 = vmax.f32 %v136, 0.0
    %v431 = vmax.f32 %v137, 0.0
    %v432 = vmax.f32 %v138, 0.0
    %v433 = vmax.f32 %v139, 0.0
    %v434 = vmax.f32 %v140, 0.0
    %v435 = vmax.f32 %v141, 0.0
    %v436 = vmax.f32 %v142, 0.0
    %v437 = vmax.f32 %v143, 0.0
    %v438 = vmax.f32 %v144, 0.0
    %v439 = vmax.f32 %v145, 0.0
    %v440 = vmax.f32 %v146, 0.0
    %v441 = vmax.f32 %v147, 0.0
    %v442 = vmax.f32 %v148, 0.0
    %v443 = vmax.f32 %v149, 0.0
    %v444 = vmax.f32 %v150, 0.0
    %v445 = vmax.f32 %v151, 0.0
    %v446 = vmax.f32 %v152, 0.0
    %v447 = vmax.f32 %v153, 0.0
    %v448 = vmax.f32 %v154, 0.0
    %v449 = vmax.f32 %v155, 0.0
    %v450 = vmax.f32 %v156, 0.0
    %v451 = vmax.f32 %v157, 0.0
    %v452 = vmax.f32 %v158, 0.0
    %v453 = vmax.f32 %v159, 0.0
    %v454 = vmax.f32 %v160, 0.0
    %v455 = vmax.f32 %v161, 0.0
    %v456 = vmax.f32 %v162, 0.0
    %v457 = vmax.f32 %v163, 0.0
    %v458 = vmax.f32 %v164, 0.0
    %v459 = vmax.f32 %v165, 0.0
    %v460 = vmax.f32 %v166, 0.0
    %v461 = vmax.f32 %v167, 0.0
    %v462 = vmax.f32 %v168, 0.0
    %v463 = vmax.f32 %v169, 0.0
    %v464 = vmax.f32 %v170, 0.0
    %v465 = vmax.f32 %v171, 0.0
    %v466 = vmax.f32 %v172, 0.0
    %v467 = vmax.f32 %v173, 0.0
    %v468 = vmax.f32 %v174, 0.0
    %v469 = vmax.f32 %v175, 0.0
    %v470 = vmax.f32 %v176, 0.0
    %v471 = vmax.f32 %v177, 0.0
    %v472 = vmax.f32 %v178, 0.0
    %v473 = vmax.f32 %v179, 0.0
    %v474 = vmax.f32 %v180, 0.0
    %v475 = vmax.f32 %v181, 0.0
    %v476 = vmax.f32 %v182, 0.0
    %v477 = vmax.f32 %v183, 0.0
    %v478 = vmax.f32 %v184, 0.0
    %v479 = vmax.f32 %v185, 0.0
    %v480 = vmax.f32 %v186, 0.0
    %v481 = vmax.f32 %v187, 0.0
    %v482 = vmax.f32 %v188, 0.0
    %v483 = vmax.f32 %v189, 0.0
    %v484 = vmax.f32 %v190, 0.0
    %v485 = vmax.f32 %v191, 0.0
    %v486 = vmax.f32 %v192, 0.0
    %v487 = vmax.f32 %v193, 0.0
    %v488 = vmax.f32 %v194, 0.0
    %v489 = vmax.f32 %v195, 0.0
    %v490 = vmax.f32 %v196, 0.0
    %v491 = vmax.f32 %v197, 0.0
    %v492 = vmax.f32 %v198, 0.0
    %v493 = vmax.f32 %v199, 0.0
    %v494 = vmax.f32 %v200, 0.0
    %v495 = vmax.f32 %v201, 0.0
    %v496 = vmax.f32 %v202, 0.0
    %v497 = vmax.f32 %v203, 0.0
    %v498 = vmax.f32 %v204, 0.0
    %v499 = vmax.f32 %v205, 0.0
    %v500 = vmax.f32 %v206, 0.0
    %v501 = vmax.f32 %v207, 0.0
    %v502 = vmax.f32 %v208, 0.0
    %v503 = vmax.f32 %v209, 0.0
    %v504 = vmax.f32 %v210, 0.0
    %v505 = vmax.f32 %v211, 0.0
    %v506 = vmax.f32 %v212, 0.0
    %v507 = vmax.f32 %v213, 0.0
    %v508 = vmax.f32 %v214, 0.0
    %v509 = vmax.f32 %v215, 0.0
    %v510 = vmax.f32 %v216, 0.0
    %v511 = vmax.f32 %v217, 0.0
    %v512 = vmax.f32 %v218, 0.0
    %v513 = vmax.f32 %v219, 0.0
    %v514 = vmax.f32 %v220, 0.0
    %v515 = vmax.f32 %v221, 0.0
    %v516 = vmax.f32 %v222, 0.0
    %v517 = vmax.f32 %v223, 0.0
    %v518 = vmax.f32 %v224, 0.0
    %v519 = vmax.f32 %v225, 0.0
    %v520 = vmax.f32 %v226, 0.0
    %v521 = vmax.f32 %v227, 0.0
    %v522 = vmax.f32 %v228, 0.0
    %v523 = vmax.f32 %v229, 0.0
    %v524 = vmax.f32 %v230, 0.0
    %v525 = vmax.f32 %v231, 0.0
    %v526 = vmax.f32 %v232, 0.0
    %v527 = vmax.f32 %v233, 0.0
    %v528 = vmax.f32 %v234, 0.0
    %v529 = vmax.f32 %v235, 0.0
    %v530 = vmax.f32 %v236, 0.0
    %v531 = vmax.f32 %v237, 0.0
    %v532 = vmax.f32 %v238, 0.0
    %v533 = vmax.f32 %v239, 0.0
    %v534 = vmax.f32 %v240, 0.0
    %v535 = vmax.f32 %v241, 0.0
    %v536 = vmax.f32 %v242, 0.0
    %v537 = vmax.f32 %v243, 0.0
    %v538 = vmax.f32 %v244, 0.0
    %v539 = vmax.f32 %v245, 0.0
    %v540 = vmax.f32 %v246, 0.0
    %v541 = vmax.f32 %v247, 0.0
    %v542 = vmax.f32 %v248, 0.0
    %v543 = vmax.f32 %v249, 0.0
    %v544 = vmax.f32 %v250, 0.0
    %v545 = vmax.f32 %v251, 0.0
    %v546 = vmax.f32 %v252, 0.0
    %v547 = vmax.f32 %v253, 0.0
    %v548 = vmax.f32 %v254, 0.0
    %v549 = vmax.f32 %v255, 0.0
    %v550 = vmax.f32 %v256, 0.0
    %v551 = vmax.f32 %v257, 0.0
    %v552 = vmax.f32 %v258, 0.0
    %v553 = vmax.f32 %v259, 0.0
    %v554 = vmax.f32 %v260, 0.0
    %v555 = vmax.f32 %v261, 0.0
    %v556 = vmax.f32 %v262, 0.0
    %v557 = vmax.f32 %v263, 0.0
    %v558 = vmax.f32 %v264, 0.0
    %v559 = vmax.f32 %v265, 0.0
    %v560 = vmax.f32 %v266, 0.0
    %v561 = vmax.f32 %v267, 0.0
    %v562 = vmax.f32 %v268, 0.0
    %v563 = vmax.f32 %v269, 0.0
    %v564 = vmax.f32 %v270, 0.0
    %v565 = vmax.f32 %v271, 0.0
    %v566 = vmax.f32 %v272, 0.0
    %v567 = vmax.f32 %v273, 0.0
    %v568 = vmax.f32 %v274, 0.0
    %v569 = vmax.f32 %v275, 0.0
    %v570 = vmax.f32 %v276, 0.0
    %v571 = vmax.f32 %v277, 0.0
    %v572 = vmax.f32 %v278, 0.0
    %v573 = vmax.f32 %v279, 0.0
    %v574 = vmax.f32 %v280, 0.0
    %v575 = vmax.f32 %v281, 0.0
    %v576 = vmax.f32 %v282, 0.0
    %v577 = vmax.f32 %v283, 0.0
    %v578 = vmax.f32 %v284, 0.0
    %v579 = vmax.f32 %v285, 0.0
    %v580 = vmax.f32 %v286, 0.0
    %v581 = vmax.f32 %v287, 0.0
    %v582 = vmax.f32 %v288, 0.0
    %v583 = vmax.f32 %v289, 0.0
    %v584 = vmax.f32 %v290, 0.0
    %v585 = vmax.f32 %v291, 0.0
    %v586 = vmax.f32 %v292, 0.0
    %v587 = vmax.f32 %v293, 0.0
    %v588 = vmax.f32 %v294, 0.0
    %v589 = vmax.f32 %v295, 0.0
    %v590 = vmax.f32 %v296, 0.0
    %v591 = vmax.f32 %v297, 0.0
    %v592 = vmax.f32 %v298, 0.0
    %v593 = vmax.f32 %v299, 0.0
    %v594 = vmax.f32 %v300, 0.0
    %v595 = vmax.f32 %v301, 0.0
    %v596 = vmax.f32 %v302, 0.0
    %v597 = vmax.f32 %v303, 0.0
    %v598 = vmax.f32 %v304, 0.0
    %v599 = vmax.f32 %v305, 0.0
    %v600 = vmax.f32 %v306, 0.0
    %v601 = vmax.f32 %v307, 0.0
    %v602 = vmax.f32 %v308, 0.0
    %v603 = vmax.f32 %v309, 0.0
    %v604 = vmax.f32 %v310, 0.0
    %v605 = vmax.f32 %v311, 0.0
    %v606 = vmax.f32 %v312, 0.0
    %v607 = vmax.f32 %v313, 0.0
    %v608 = vmax.f32 %v314, 0.0
    %v609 = vmax.f32 %v315, 0.0
    %v610 = vmax.f32 %v316, 0.0
    %611 = vst [vmem:[#allocation5] sm:$0xff] %v317
    %612 = vst [vmem:[#allocation5 + $0x8] sm:$0xff] %v318
    %613 = vst [vmem:[#allocation5 + $0x10] sm:$0xff] %v319
    %614 = vst [vmem:[#allocation5 + $0x18] sm:$0xff] %v320
    %615 = vst [vmem:[#allocation5 + $0x20] sm:$0xff] %v321
    %616 = vst [vmem:[#allocation5 + $0x28] sm:$0xff] %v322
    %617 = vst [vmem:[#allocation5 + $0x30] sm:$0xff] %v323
    %618 = vst [vmem:[#allocation5 + $0x38] sm:$0xff] %v324
    %619 = vst [vmem:[#allocation5 + $0x40] sm:$0xff] %v325
    %620 = vst [vmem:[#allocation5 + $0x48] sm:$0xff] %v326
    %621 = vst [vmem:[#allocation5 + $0x50] sm:$0xff] %v327
    %622 = vst [vmem:[#allocation5 + $0x58] sm:$0xff] %v328
    %623 = vst [vmem:[#allocation5 + $0x60] sm:$0xff] %v329
    %624 = vst [vmem:[#allocation5 + $0x68] sm:$0xff] %v330
    %625 = vst [vmem:[#allocation5 + $0x70] sm:$0xff] %v331
    %626 = vst [vmem:[#allocation5 + $0x78] sm:$0xff] %v332
    %627 = vst [vmem:[#allocation5 + $0x80] sm:$0xff] %v333
    %628 = vst [vmem:[#allocation5 + $0x88] sm:$0xff] %v334
    %629 = vst [vmem:[#allocation5 + $0x90] sm:$0xff] %v335
    %630 = vst [vmem:[#allocation5 + $0x98] sm:$0xff] %v336
    %631 = vst [vmem:[#allocation5 + $0xa0] sm:$0xff] %v337
    %632 = vst [vmem:[#allocation5 + $0xa8] sm:$0xff] %v338
    %633 = vst [vmem:[#allocation5 + $0xb0] sm:$0xff] %v339
    %634 = vst [vmem:[#allocation5 + $0xb8] sm:$0xff] %v340
    %635 = vst [vmem:[#allocation5 + $0xc0] sm:$0xff] %v341
    %636 = vst [vmem:[#allocation5 + $0xc8] sm:$0xff] %v342
    %637 = vst [vmem:[#allocation5 + $0xd0] sm:$0xff] %v343
    %638 = vst [vmem:[#allocation5 + $0xd8] sm:$0xff] %v344
    %639 = vst [vmem:[#allocation5 + $0xe0] sm:$0xff] %v345
    %640 = vst [vmem:[#allocation5 + $0xe8] sm:$0xff] %v346
    %641 = vst [vmem:[#allocation5 + $0xf0] sm:$0xff] %v347
    %642 = vst [vmem:[#allocation5 + $0xf8] sm:$0xff] %v348
    %643 = vst [vmem:[#allocation5 + $0x100] sm:$0xff] %v349
    %644 = vst [vmem:[#allocation5 + $0x108] sm:$0xff] %v350
    %645 = vst [vmem:[#allocation5 + $0x110] sm:$0xff] %v351
    %646 = vst [vmem:[#allocation5 + $0x118] sm:$0xff] %v352
    %647 = vst [vmem:[#allocation5 + $0x120] sm:$0xff] %v353
    %648 = vst [vmem:[#allocation5 + $0x128] sm:$0xff] %v354
    %649 = vst [vmem:[#allocation5 + $0x130] sm:$0xff] %v355
    %650 = vst [vmem:[#allocation5 + $0x138] sm:$0xff] %v356
    %651 = vst [vmem:[#allocation5 + $0x140] sm:$0xff] %v357
    %652 = vst [vmem:[#allocation5 + $0x148] sm:$0xff] %v358
    %653 = vst [vmem:[#allocation5 + $0x150] sm:$0xff] %v359
    %654 = vst [vmem:[#allocation5 + $0x158] sm:$0xff] %v360
    %655 = vst [vmem:[#allocation5 + $0x160] sm:$0xff] %v361
    %656 = vst [vmem:[#allocation5 + $0x168] sm:$0xff] %v362
    %657 = vst [vmem:[#allocation5 + $0x170] sm:$0xff] %v363
    %658 = vst [vmem:[#allocation5 + $0x178] sm:$0xff] %v364
    %659 = vst [vmem:[#allocation5 + $0x180] sm:$0xff] %v365
    %660 = vst [vmem:[#allocation5 + $0x188] sm:$0xff] %v366
    %661 = vst [vmem:[#allocation5 + $0x190] sm:$0xff] %v367
    %662 = vst [vmem:[#allocation5 + $0x198] sm:$0xff] %v368
    %663 = vst [vmem:[#allocation5 + $0x1a0] sm:$0xff] %v369
    %664 = vst [vmem:[#allocation5 + $0x1a8] sm:$0xff] %v370
    %665 = vst [vmem:[#allocation5 + $0x1b0] sm:$0xff] %v371
    %666 = vst [vmem:[#allocation5 + $0x1b8] sm:$0xff] %v372
    %667 = vst [vmem:[#allocation5 + $0x1c0] sm:$0xff] %v373
    %668 = vst [vmem:[#allocation5 + $0x1c8] sm:$0xff] %v374
    %669 = vst [vmem:[#allocation5 + $0x1d0] sm:$0xff] %v375
    %670 = vst [vmem:[#allocation5 + $0x1d8] sm:$0xff] %v376
    %671 = vst [vmem:[#allocation5 + $0x1e0] sm:$0xff] %v377
    %672 = vst [vmem:[#allocation5 + $0x1e8] sm:$0xff] %v378
    %673 = vst [vmem:[#allocation5 + $0x1f0] sm:$0xff] %v379
    %674 = vst [vmem:[#allocation5 + $0x1f8] sm:$0xff] %v380
    %675 = vst [vmem:[#allocation5 + $0x200] sm:$0xff] %v381
    %676 = vst [vmem:[#allocation5 + $0x208] sm:$0xff] %v382
    %677 = vst [vmem:[#allocation5 + $0x210] sm:$0xff] %v383
    %678 = vst [vmem:[#allocation5 + $0x218] sm:$0xff] %v384
    %679 = vst [vmem:[#allocation5 + $0x220] sm:$0xff] %v385
    %680 = vst [vmem:[#allocation5 + $0x228] sm:$0xff] %v386
    %681 = vst [vmem:[#allocation5 + $0x230] sm:$0xff] %v387
    %682 = vst [vmem:[#allocation5 + $0x238] sm:$0xff] %v388
    %683 = vst [vmem:[#allocation5 + $0x240] sm:$0xff] %v389
    %684 = vst [vmem:[#allocation5 + $0x248] sm:$0xff] %v390
    %685 = vst [vmem:[#allocation5 + $0x250] sm:$0xff] %v391
    %686 = vst [vmem:[#allocation5 + $0x258] sm:$0xff] %v392
    %687 = vst [vmem:[#allocation5 + $0x260] sm:$0xff] %v393
    %688 = vst [vmem:[#allocation5 + $0x268] sm:$0xff] %v394
    %689 = vst [vmem:[#allocation5 + $0x270] sm:$0xff] %v395
    %690 = vst [vmem:[#allocation5 + $0x278] sm:$0xff] %v396
    %691 = vst [vmem:[#allocation5 + $0x280] sm:$0xff] %v397
    %692 = vst [vmem:[#allocation5 + $0x288] sm:$0xff] %v398
    %693 = vst [vmem:[#allocation5 + $0x290] sm:$0xff] %v399
    %694 = vst [vmem:[#allocation5 + $0x298] sm:$0xff] %v400
    %695 = vst [vmem:[#allocation5 + $0x2a0] sm:$0xff] %v401
    %696 = vst [vmem:[#allocation5 + $0x2a8] sm:$0xff] %v402
    %697 = vst [vmem:[#allocation5 + $0x2b0] sm:$0xff] %v403
    %698 = vst [vmem:[#allocation5 + $0x2b8] sm:$0xff] %v404
    %699 = vst [vmem:[#allocation5 + $0x2c0] sm:$0xff] %v405
    %700 = vst [vmem:[#allocation5 + $0x2c8] sm:$0xff] %v406
    %701 = vst [vmem:[#allocation5 + $0x2d0] sm:$0xff] %v407
    %702 = vst [vmem:[#allocation5 + $0x2d8] sm:$0xff] %v408
    %703 = vst [vmem:[#allocation5 + $0x2e0] sm:$0xff] %v409
    %704 = vst [vmem:[#allocation5 + $0x2e8] sm:$0xff] %v410
    %705 = vst [vmem:[#allocation5 + $0x2f0] sm:$0xff] %v411
    %706 = vst [vmem:[#allocation5 + $0x2f8] sm:$0xff] %v412
    %707 = vst [vmem:[#allocation5 + $0x300] sm:$0xff] %v413
    %708 = vst [vmem:[#allocation5 + $0x308] sm:$0xff] %v414
    %709 = vst [vmem:[#allocation5 + $0x310] sm:$0xff] %v415
    %710 = vst [vmem:[#allocation5 + $0x318] sm:$0xff] %v416
    %711 = vst [vmem:[#allocation5 + $0x320] sm:$0xff] %v417
    %712 = vst [vmem:[#allocation5 + $0x328] sm:$0xff] %v418
    %713 = vst [vmem:[#allocation5 + $0x330] sm:$0xff] %v419
    %714 = vst [vmem:[#allocation5 + $0x338] sm:$0xff] %v420
    %715 = vst [vmem:[#allocation5 + $0x340] sm:$0xff] %v421
    %716 = vst [vmem:[#allocation5 + $0x348] sm:$0xff] %v422
    %717 = vst [vmem:[#allocation5 + $0x350] sm:$0xff] %v423
    %718 = vst [vmem:[#allocation5 + $0x358] sm:$0xff] %v424
    %719 = vst [vmem:[#allocation5 + $0x360] sm:$0xff] %v425
    %720 = vst [vmem:[#allocation5 + $0x368] sm:$0xff] %v426
    %721 = vst [vmem:[#allocation5 + $0x370] sm:$0xff] %v427
    %722 = vst [vmem:[#allocation5 + $0x378] sm:$0xff] %v428
    %723 = vst [vmem:[#allocation5 + $0x380] sm:$0xff] %v429
    %724 = vst [vmem:[#allocation5 + $0x388] sm:$0xff] %v430
    %725 = vst [vmem:[#allocation5 + $0x390] sm:$0xff] %v431
    %726 = vst [vmem:[#allocation5 + $0x398] sm:$0xff] %v432
    %727 = vst [vmem:[#allocation5 + $0x3a0] sm:$0xff] %v433
    %728 = vst [vmem:[#allocation5 + $0x3a8] sm:$0xff] %v434
    %729 = vst [vmem:[#allocation5 + $0x3b0] sm:$0xff] %v435
    %730 = vst [vmem:[#allocation5 + $0x3b8] sm:$0xff] %v436
    %731 = vst [vmem:[#allocation5 + $0x3c0] sm:$0xff] %v437
    %732 = vst [vmem:[#allocation5 + $0x3c8] sm:$0xff] %v438
    %733 = vst [vmem:[#allocation5 + $0x3d0] sm:$0xff] %v439
    %734 = vst [vmem:[#allocation5 + $0x3d8] sm:$0xff] %v440
    %735 = vst [vmem:[#allocation5 + $0x3e0] sm:$0xff] %v441
    %736 = vst [vmem:[#allocation5 + $0x3e8] sm:$0xff] %v442
    %737 = vst [vmem:[#allocation5 + $0x3f0] sm:$0xff] %v443
    %738 = vst [vmem:[#allocation5 + $0x3f8] sm:$0xff] %v444
    %739 = vst [vmem:[#allocation5 + $0x400] sm:$0xff] %v445
    %740 = vst [vmem:[#allocation5 + $0x408] sm:$0xff] %v446
    %741 = vst [vmem:[#allocation5 + $0x410] sm:$0xff] %v447
    %742 = vst [vmem:[#allocation5 + $0x418] sm:$0xff] %v448
    %743 = vst [vmem:[#allocation5 + $0x420] sm:$0xff] %v449
    %744 = vst [vmem:[#allocation5 + $0x428] sm:$0xff] %v450
    %745 = vst [vmem:[#allocation5 + $0x430] sm:$0xff] %v451
    %746 = vst [vmem:[#allocation5 + $0x438] sm:$0xff] %v452
    %747 = vst [vmem:[#allocation5 + $0x440] sm:$0xff] %v453
    %748 = vst [vmem:[#allocation5 + $0x448] sm:$0xff] %v454
    %749 = vst [vmem:[#allocation5 + $0x450] sm:$0xff] %v455
    %750 = vst [vmem:[#allocation5 + $0x458] sm:$0xff] %v456
    %751 = vst [vmem:[#allocation5 + $0x460] sm:$0xff] %v457
    %752 = vst [vmem:[#allocation5 + $0x468] sm:$0xff] %v458
    %753 = vst [vmem:[#allocation5 + $0x470] sm:$0xff] %v459
    %754 = vst [vmem:[#allocation5 + $0x478] sm:$0xff] %v460
    %755 = vst [vmem:[#allocation5 + $0x480] sm:$0xff] %v461
    %756 = vst [vmem:[#allocation5 + $0x488] sm:$0xff] %v462
    %757 = vst [vmem:[#allocation5 + $0x490] sm:$0xff] %v463
    %758 = vst [vmem:[#allocation5 + $0x498] sm:$0xff] %v464
    %759 = vst [vmem:[#allocation5 + $0x4a0] sm:$0xff] %v465
    %760 = vst [vmem:[#allocation5 + $0x4a8] sm:$0xff] %v466
    %761 = vst [vmem:[#allocation5 + $0x4b0] sm:$0xff] %v467
    %762 = vst [vmem:[#allocation5 + $0x4b8] sm:$0xff] %v468
    %763 = vst [vmem:[#allocation5 + $0x4c0] sm:$0xff] %v469
    %764 = vst [vmem:[#allocation5 + $0x4c8] sm:$0xff] %v470
    %765 = vst [vmem:[#allocation5 + $0x4d0] sm:$0xff] %v471
    %766 = vst [vmem:[#allocation5 + $0x4d8] sm:$0xff] %v472
    %767 = vst [vmem:[#allocation5 + $0x4e0] sm:$0xff] %v473
    %768 = vst [vmem:[#allocation5 + $0x4e8] sm:$0xff] %v474
    %769 = vst [vmem:[#allocation5 + $0x4f0] sm:$0xff] %v475
    %770 = vst [vmem:[#allocation5 + $0x4f8] sm:$0xff] %v476
    %771 = vst [vmem:[#allocation5 + $0x500] sm:$0xff] %v477
    %772 = vst [vmem:[#allocation5 + $0x508] sm:$0xff] %v478
    %773 = vst [vmem:[#allocation5 + $0x510] sm:$0xff] %v479
    %774 = vst [vmem:[#allocation5 + $0x518] sm:$0xff] %v480
    %775 = vst [vmem:[#allocation5 + $0x520] sm:$0xff] %v481
    %776 = vst [vmem:[#allocation5 + $0x528] sm:$0xff] %v482
    %777 = vst [vmem:[#allocation5 + $0x530] sm:$0xff] %v483
    %778 = vst [vmem:[#allocation5 + $0x538] sm:$0xff] %v484
    %779 = vst [vmem:[#allocation5 + $0x540] sm:$0xff] %v485
    %780 = vst [vmem:[#allocation5 + $0x548] sm:$0xff] %v486
    %781 = vst [vmem:[#allocation5 + $0x550] sm:$0xff] %v487
    %782 = vst [vmem:[#allocation5 + $0x558] sm:$0xff] %v488
    %783 = vst [vmem:[#allocation5 + $0x560] sm:$0xff] %v489
    %784 = vst [vmem:[#allocation5 + $0x568] sm:$0xff] %v490
    %785 = vst [vmem:[#allocation5 + $0x570] sm:$0xff] %v491
    %786 = vst [vmem:[#allocation5 + $0x578] sm:$0xff] %v492
    %787 = vst [vmem:[#allocation5 + $0x580] sm:$0xff] %v493
    %788 = vst [vmem:[#allocation5 + $0x588] sm:$0xff] %v494
    %789 = vst [vmem:[#allocation5 + $0x590] sm:$0xff] %v495
    %790 = vst [vmem:[#allocation5 + $0x598] sm:$0xff] %v496
    %791 = vst [vmem:[#allocation5 + $0x5a0] sm:$0xff] %v497
    %792 = vst [vmem:[#allocation5 + $0x5a8] sm:$0xff] %v498
    %793 = vst [vmem:[#allocation5 + $0x5b0] sm:$0xff] %v499
    %794 = vst [vmem:[#allocation5 + $0x5b8] sm:$0xff] %v500
    %795 = vst [vmem:[#allocation5 + $0x5c0] sm:$0xff] %v501
    %796 = vst [vmem:[#allocation5 + $0x5c8] sm:$0xff] %v502
    %797 = vst [vmem:[#allocation5 + $0x5d0] sm:$0xff] %v503
    %798 = vst [vmem:[#allocation5 + $0x5d8] sm:$0xff] %v504
    %799 = vst [vmem:[#allocation5 + $0x5e0] sm:$0xff] %v505
    %800 = vst [vmem:[#allocation5 + $0x5e8] sm:$0xff] %v506
    %801 = vst [vmem:[#allocation5 + $0x5f0] sm:$0xff] %v507
    %802 = vst [vmem:[#allocation5 + $0x5f8] sm:$0xff] %v508
    %803 = vst [vmem:[#allocation5 + $0x600] sm:$0xff] %v509
    %804 = vst [vmem:[#allocation5 + $0x608] sm:$0xff] %v510
    %805 = vst [vmem:[#allocation5 + $0x610] sm:$0xff] %v511
    %806 = vst [vmem:[#allocation5 + $0x618] sm:$0xff] %v512
    %807 = vst [vmem:[#allocation5 + $0x620] sm:$0xff] %v513
    %808 = vst [vmem:[#allocation5 + $0x628] sm:$0xff] %v514
    %809 = vst [vmem:[#allocation5 + $0x630] sm:$0xff] %v515
    %810 = vst [vmem:[#allocation5 + $0x638] sm:$0xff] %v516
    %811 = vst [vmem:[#allocation5 + $0x640] sm:$0xff] %v517
    %812 = vst [vmem:[#allocation5 + $0x648] sm:$0xff] %v518
    %813 = vst [vmem:[#allocation5 + $0x650] sm:$0xff] %v519
    %814 = vst [vmem:[#allocation5 + $0x658] sm:$0xff] %v520
    %815 = vst [vmem:[#allocation5 + $0x660] sm:$0xff] %v521
    %816 = vst [vmem:[#allocation5 + $0x668] sm:$0xff] %v522
    %817 = vst [vmem:[#allocation5 + $0x670] sm:$0xff] %v523
    %818 = vst [vmem:[#allocation5 + $0x678] sm:$0xff] %v524
    %819 = vst [vmem:[#allocation5 + $0x680] sm:$0xff] %v525
    %820 = vst [vmem:[#allocation5 + $0x688] sm:$0xff] %v526
    %821 = vst [vmem:[#allocation5 + $0x690] sm:$0xff] %v527
    %822 = vst [vmem:[#allocation5 + $0x698] sm:$0xff] %v528
    %823 = vst [vmem:[#allocation5 + $0x6a0] sm:$0xff] %v529
    %824 = vst [vmem:[#allocation5 + $0x6a8] sm:$0xff] %v530
    %825 = vst [vmem:[#allocation5 + $0x6b0] sm:$0xff] %v531
    %826 = vst [vmem:[#allocation5 + $0x6b8] sm:$0xff] %v532
    %827 = vst [vmem:[#allocation5 + $0x6c0] sm:$0xff] %v533
    %828 = vst [vmem:[#allocation5 + $0x6c8] sm:$0xff] %v534
    %829 = vst [vmem:[#allocation5 + $0x6d0] sm:$0xff] %v535
    %830 = vst [vmem:[#allocation5 + $0x6d8] sm:$0xff] %v536
    %831 = vst [vmem:[#allocation5 + $0x6e0] sm:$0xff] %v537
    %832 = vst [vmem:[#allocation5 + $0x6e8] sm:$0xff] %v538
    %833 = vst [vmem:[#allocation5 + $0x6f0] sm:$0xff] %v539
    %834 = vst [vmem:[#allocation5 + $0x6f8] sm:$0xff] %v540
    %835 = vst [vmem:[#allocation5 + $0x700] sm:$0xff] %v541
    %836 = vst [vmem:[#allocation5 + $0x708] sm:$0xff] %v542
    %837 = vst [vmem:[#allocation5 + $0x710] sm:$0xff] %v543
    %838 = vst [vmem:[#allocation5 + $0x718] sm:$0xff] %v544
    %839 = vst [vmem:[#allocation5 + $0x720] sm:$0xff] %v545
    %840 = vst [vmem:[#allocation5 + $0x728] sm:$0xff] %v546
    %841 = vst [vmem:[#allocation5 + $0x730] sm:$0xff] %v547
    %842 = vst [vmem:[#allocation5 + $0x738] sm:$0xff] %v548
    %843 = vst [vmem:[#allocation5 + $0x740] sm:$0xff] %v549
    %844 = vst [vmem:[#allocation5 + $0x748] sm:$0xff] %v550
    %845 = vst [vmem:[#allocation5 + $0x750] sm:$0xff] %v551
    %846 = vst [vmem:[#allocation5 + $0x758] sm:$0xff] %v552
    %847 = vst [vmem:[#allocation5 + $0x760] sm:$0xff] %v553
    %848 = vst [vmem:[#allocation5 + $0x768] sm:$0xff] %v554
    %849 = vst [vmem:[#allocation5 + $0x770] sm:$0xff] %v555
    %850 = vst [vmem:[#allocation5 + $0x778] sm:$0xff] %v556
    %851 = vst [vmem:[#allocation5 + $0x780] sm:$0xff] %v557
    %852 = vst [vmem:[#allocation5 + $0x788] sm:$0xff] %v558
    %853 = vst [vmem:[#allocation5 + $0x790] sm:$0xff] %v559
    %854 = vst [vmem:[#allocation5 + $0x798] sm:$0xff] %v560
    %855 = vst [vmem:[#allocation5 + $0x7a0] sm:$0xff] %v561
    %856 = vst [vmem:[#allocation5 + $0x7a8] sm:$0xff] %v562
    %857 = vst [vmem:[#allocation5 + $0x7b0] sm:$0xff] %v563
    %858 = vst [vmem:[#allocation5 + $0x7b8] sm:$0xff] %v564
    %859 = vst [vmem:[#allocation5 + $0x7c0] sm:$0xff] %v565
    %860 = vst [vmem:[#allocation5 + $0x7c8] sm:$0xff] %v566
    %861 = vst [vmem:[#allocation5 + $0x7d0] sm:$0xff] %v567
    %862 = vst [vmem:[#allocation5 + $0x7d8] sm:$0xff] %v568
    %863 = vst [vmem:[#allocation5 + $0x7e0] sm:$0xff] %v569
    %864 = vst [vmem:[#allocation5 + $0x7e8] sm:$0xff] %v570
    %865 = vst [vmem:[#allocation5 + $0x7f0] sm:$0xff] %v571
    %866 = vst [vmem:[#allocation5 + $0x7f8] sm:$0xff] %v572
    %867 = vst [vmem:[#allocation5 + $0x800] sm:$0xff] %v573
    %868 = vst [vmem:[#allocation5 + $0x808] sm:$0xff] %v574
    %869 = vst [vmem:[#allocation5 + $0x810] sm:$0xff] %v575
    %870 = vst [vmem:[#allocation5 + $0x818] sm:$0xff] %v576
    %871 = vst [vmem:[#allocation5 + $0x820] sm:$0xff] %v577
    %872 = vst [vmem:[#allocation5 + $0x828] sm:$0xff] %v578
    %873 = vst [vmem:[#allocation5 + $0x830] sm:$0xff] %v579
    %874 = vst [vmem:[#allocation5 + $0x838] sm:$0xff] %v580
    %875 = vst [vmem:[#allocation5 + $0x840] sm:$0xff] %v581
    %876 = vst [vmem:[#allocation5 + $0x848] sm:$0xff] %v582
    %877 = vst [vmem:[#allocation5 + $0x850] sm:$0xff] %v583
    %878 = vst [vmem:[#allocation5 + $0x858] sm:$0xff] %v584
    %879 = vst [vmem:[#allocation5 + $0x860] sm:$0xff] %v585
    %880 = vst [vmem:[#allocation5 + $0x868] sm:$0xff] %v586
    %881 = vst [vmem:[#allocation5 + $0x870] sm:$0xff] %v587
    %882 = vst [vmem:[#allocation5 + $0x878] sm:$0xff] %v588
    %883 = vst [vmem:[#allocation5 + $0x880] sm:$0xff] %v589
    %884 = vst [vmem:[#allocation5 + $0x888] sm:$0xff] %v590
    %885 = vst [vmem:[#allocation5 + $0x890] sm:$0xff] %v591
    %886 = vst [vmem:[#allocation5 + $0x898] sm:$0xff] %v592
    %887 = vst [vmem:[#allocation5 + $0x8a0] sm:$0xff] %v593
    %888 = vst [vmem:[#allocation5 + $0x8a8] sm:$0xff] %v594
    %889 = vst [vmem:[#allocation5 + $0x8b0] sm:$0xff] %v595
    %890 = vst [vmem:[#allocation5 + $0x8b8] sm:$0xff] %v596
    %891 = vst [vmem:[#allocation5 + $0x8c0] sm:$0xff] %v597
    %892 = vst [vmem:[#allocation5 + $0x8c8] sm:$0xff] %v598
    %893 = vst [vmem:[#allocation5 + $0x8d0] sm:$0xff] %v599
    %894 = vst [vmem:[#allocation5 + $0x8d8] sm:$0xff] %v600
    %895 = vst [vmem:[#allocation5 + $0x8e0] sm:$0xff] %v601
    %896 = vst [vmem:[#allocation5 + $0x8e8] sm:$0xff] %v602
    %897 = vst [vmem:[#allocation5 + $0x8f0] sm:$0xff] %v603
    %898 = vst [vmem:[#allocation5 + $0x8f8] sm:$0xff] %v604
    %899 = vst [vmem:[#allocation5 + $0x900] sm:$0xff] %v605
    %900 = vst [vmem:[#allocation5 + $0x908] sm:$0xff] %v606
    %901 = vst [vmem:[#allocation5 + $0x910] sm:$0xff] %v607
    %902 = vst [vmem:[#allocation5 + $0x918] sm:$0xff] %v608
    %903 = vst [vmem:[#allocation5 + $0x920] sm:$0xff] %v609
    %904 = vst [vmem:[#allocation5 + $0x928] sm:$0xff] %v610
    // Predicated region
    $region10: #{tpu_custom_call.1} parent=1 // pred_check
      _
    $region11: #{tpu_custom_call.1} parent=1 // pred_check_branch
      %906 = sbr.rel (0) target = $region13
    $region12: #{tpu_custom_call.1} parent=1 // pred_region
      %s908 = ssub.s32 37632, 37632
      %909 = vsyncadd [#allocation4], %s908
      %s910 = sshll.u32 [#allocation5], 4
      %s911 = int_to_ptr.vmem [resolvable:$true] %s910
      %916 = dma.vmem_to_hbm [thread:$0]  %s911, 37632, %s1, [#allocation4], 256, 256, 16
    $region13: #{tpu_custom_call.1} parent=1 // pred_fallthru
      _
    // Predicated region
    $region14: #{tpu_custom_call.1} parent=1 // pred_check
      _
    $region15: #{tpu_custom_call.1} parent=1 // pred_check_branch
      %918 = sbr.rel (0) target = $region17
    $region16: #{tpu_custom_call.1} parent=1 // pred_region
      %919 = dma.done [#allocation4], 37632
    $region17: #{tpu_custom_call.1} parent=1 // pred_fallthru
      _
    %920 = vsyncpa [#allocation3], 1
    %921 = vsyncpa [#allocation4], 1

</llo_original>
